<compile_context>
chip_gen: v7x
topology: tpu7x:2x2x1
jax: 0.10.0
libtpu: 0.0.40
codegen_flags: <defaults>
</compile_context>

<pallas_src>
import functools

import jax
import jax.numpy as jnp
from jax.experimental import pallas as pl
from jax.experimental.pallas import tpu as pltpu


def _combined_loss_kernel(x_ref, t_ref, inter_ref, psum_ref, tcnt_ref, ce_ref):
    # x_ref: (1, C, TILE) logits tile; t_ref: (1, 1, TILE) int32 targets tile
    # outputs: (1, C, 1) per-batch-element running accumulators.
    @pl.when(pl.program_id(1) == 0)
    def _():
        inter_ref[...] = jnp.zeros_like(inter_ref)
        psum_ref[...] = jnp.zeros_like(psum_ref)
        tcnt_ref[...] = jnp.zeros_like(tcnt_ref)
        ce_ref[...] = jnp.zeros_like(ce_ref)

    x = x_ref[0].astype(jnp.float32)                 # (C, TILE), lane-dense pixels
    t = t_ref[0]                                     # (1, TILE) int32

    c, tile = x.shape

    # Numerically stable softmax over the class (sublane) axis.
    m = jnp.max(x, axis=0, keepdims=True)            # (1, TILE)
    e = jnp.exp(x - m)                               # (C, TILE)
    s = jnp.sum(e, axis=0, keepdims=True)            # (1, TILE)  (>= 1)
    probs = e / s                                    # (C, TILE)  exact (1e-5 tol)

    class_ids = jax.lax.broadcasted_iota(jnp.int32, (c, tile), 0)
    onehot = (t == class_ids).astype(jnp.float32)    # (C, TILE)

    # Per-pixel CE = m + log(s) - x[target]; keep it per target class so the
    # accumulation reuses the same lane-reduce as the dice sums.
    ce_px = onehot * ((m + jnp.log(s)) - x)          # (C, TILE), nonzero on target row

    inter_ref[0] += jnp.sum(probs * onehot, axis=1, keepdims=True)   # (C, 1)
    psum_ref[0] += jnp.sum(probs, axis=1, keepdims=True)             # (C, 1)
    tcnt_ref[0] += jnp.sum(onehot, axis=1, keepdims=True)            # (C, 1)
    ce_ref[0] += jnp.sum(ce_px, axis=1, keepdims=True)               # (C, 1)


def _choose_tile(hw, max_tile):
    """Largest pixel tile: full row if it fits, else the biggest multiple of
    128 that divides H*W and is <= max_tile; fall back to the full row."""
    if hw <= max_tile:
        return hw
    t = max_tile - (max_tile % 128)
    while t >= 128:
        if hw % t == 0:
            return t
        t -= 128
    return hw


@functools.partial(jax.jit, static_argnames=("alpha", "beta", "max_tile"))
def combined_loss(logits_nchw, targets_nhw, *, alpha=0.7, beta=0.3, max_tile=8192):
    n, c, h, w = logits_nchw.shape
    hw = h * w
    p = n * hw
    tile = _choose_tile(hw, max_tile)

    # Native-layout views: no transpose, no HBM pass.
    x = logits_nchw.reshape(n, c, hw)                 # keep input dtype (f32 / bf16)
    t = targets_nhw.reshape(n, 1, hw).astype(jnp.int32)

    grid = (n, hw // tile)
    out_shapes = tuple(
        jax.ShapeDtypeStruct((n, c, 1), jnp.float32) for _ in range(4)
    )
    acc_spec = pl.BlockSpec((1, c, 1), lambda b, i: (b, 0, 0))

    inter, psum, tcnt, ce = pl.pallas_call(
        _combined_loss_kernel,
        out_shape=out_shapes,
        grid_spec=pltpu.PrefetchScalarGridSpec(
            num_scalar_prefetch=0,
            grid=grid,
            in_specs=[
                pl.BlockSpec((1, c, tile), lambda b, i: (b, 0, i)),
                pl.BlockSpec((1, 1, tile), lambda b, i: (b, 0, i)),
            ],
            out_specs=[acc_spec, acc_spec, acc_spec, acc_spec],
        ),
        compiler_params=pltpu.CompilerParams(
            dimension_semantics=("parallel", "arbitrary"),
        ),
    )(x, t)

    # Tiny O(N*C) epilogue in plain JAX.
    inter = jnp.sum(inter, axis=0)[:, 0]              # (C,)
    psum = jnp.sum(psum, axis=0)[:, 0]                # (C,)
    tcnt = jnp.sum(tcnt, axis=0)[:, 0]                # (C,)
    ce_sum = jnp.sum(ce)

    # smp DiceLoss(mode='multiclass', from_logits=True): smooth=0.0, eps=1e-7,
    # per-class soft dice over (batch, spatial), masked by class presence,
    # then mean over classes.
    eps = 1e-7
    cardinality = psum + tcnt
    dice_score = (2.0 * inter) / jnp.maximum(cardinality, eps)
    per_class = (1.0 - dice_score) * (tcnt > 0).astype(jnp.float32)
    dice = jnp.mean(per_class)

    # nn.CrossEntropyLoss (weight=None): mean over all pixels.
    ce_mean = ce_sum / jnp.float32(p)

    return alpha * dice + beta * ce_mean


def _reference_combined_loss(logits_nchw, targets_nhw, alpha=0.7, beta=0.3):
    """Pure-JAX reference mirroring smp DiceLoss + nn.CrossEntropyLoss."""
    n, c, h, w = logits_nchw.shape
    x = logits_nchw.astype(jnp.float32)
    logp = jax.nn.log_softmax(x, axis=1)                       # (N,C,H,W)
    probs = jnp.exp(logp)
    onehot = jax.nn.one_hot(targets_nhw, c, axis=1, dtype=jnp.float32)
    dims = (0, 2, 3)
    inter = jnp.sum(probs * onehot, axis=dims)
    card = jnp.sum(probs + onehot, axis=dims)
    score = 2.0 * inter / jnp.maximum(card, 1e-7)
    per_class = (1.0 - score) * (jnp.sum(onehot, axis=dims) > 0)
    dice = jnp.mean(per_class)
    ce = -jnp.mean(jnp.sum(logp * onehot, axis=1))
    return alpha * dice + beta * ce


if __name__ == "__main__":
    # Small shapes consistent with a segmentation head: N=2, C=4, H=W=16.
    key = jax.random.PRNGKey(0)
    k1, k2 = jax.random.split(key)
    num_classes = 4
    logits = jax.random.normal(k1, (2, num_classes, 16, 16), dtype=jnp.float32)
    targets = jax.random.randint(k2, (2, 16, 16), 0, num_classes, dtype=jnp.int32)

    out = combined_loss(logits, targets, alpha=0.7, beta=0.3)
    out = jax.block_until_ready(out)

    ref = jax.block_until_ready(_reference_combined_loss(logits, targets))
    assert jnp.allclose(out, ref, rtol=1e-5, atol=1e-5), (out, ref)

    print("KERNEL_OK")
</pallas_src>

<mosaic_0001>
module attributes {stable_mosaic.version = 11 : i64} {
  func.func @_combined_loss_kernel(%arg0: i32, %arg1: i32, %arg2: memref<1x4x256xf32, #tpu.memory_space<vmem>>, %arg3: memref<1x1x256xi32, #tpu.memory_space<vmem>>, %arg4: memref<1x4x1xf32, #tpu.memory_space<vmem>>, %arg5: memref<1x4x1xf32, #tpu.memory_space<vmem>>, %arg6: memref<1x4x1xf32, #tpu.memory_space<vmem>>, %arg7: memref<1x4x1xf32, #tpu.memory_space<vmem>>) attributes {dimension_semantics = [#tpu.dimension_semantics<parallel>, #tpu.dimension_semantics<arbitrary>], iteration_bounds = array<i64: 2, 1>, scalar_prefetch = 0 : i64, scratch_operands = 0 : i64, tpu.core_type = #tpu.core_type<tc>, window_params = [{transform_indices = @transform_0, window_bounds = array<i64: 1, 4, 256>}, {transform_indices = @transform_1, window_bounds = array<i64: 1, 1, 256>}, {transform_indices = @transform_2, window_bounds = array<i64: 1, 4, 1>}, {transform_indices = @transform_3, window_bounds = array<i64: 1, 4, 1>}, {transform_indices = @transform_4, window_bounds = array<i64: 1, 4, 1>}, {transform_indices = @transform_5, window_bounds = array<i64: 1, 4, 1>}]} {
    %c0_i32 = arith.constant 0 : i32
    %0 = arith.cmpi eq, %arg1, %c0_i32 : i32
    %1 = arith.extui %0 : i1 to i32
    %c0_i32_0 = arith.constant 0 : i32
    %2 = arith.cmpi ne, %1, %c0_i32_0 : i32
    scf.if %2 {
      %cst_35 = arith.constant 0.000000e+00 : f32
      %59 = vector.broadcast %cst_35 : f32 to vector<1x4x1xf32>
      %c0_36 = arith.constant 0 : index
      %c0_37 = arith.constant 0 : index
      %c0_38 = arith.constant 0 : index
      %60 = vector.load %arg4[%c0_36, %c0_37, %c0_38] : memref<1x4x1xf32, #tpu.memory_space<vmem>>, vector<1x4x1xf32>
      tpu.vector_store %arg4[%c0_36, %c0_37, %c0_38], %59 {strides = array<i32>} : memref<1x4x1xf32, #tpu.memory_space<vmem>>, vector<1x4x1xf32>,
      %cst_39 = arith.constant 0.000000e+00 : f32
      %61 = vector.broadcast %cst_39 : f32 to vector<1x4x1xf32>
      %c0_40 = arith.constant 0 : index
      %c0_41 = arith.constant 0 : index
      %c0_42 = arith.constant 0 : index
      %62 = vector.load %arg5[%c0_40, %c0_41, %c0_42] : memref<1x4x1xf32, #tpu.memory_space<vmem>>, vector<1x4x1xf32>
      tpu.vector_store %arg5[%c0_40, %c0_41, %c0_42], %61 {strides = array<i32>} : memref<1x4x1xf32, #tpu.memory_space<vmem>>, vector<1x4x1xf32>,
      %cst_43 = arith.constant 0.000000e+00 : f32
      %63 = vector.broadcast %cst_43 : f32 to vector<1x4x1xf32>
      %c0_44 = arith.constant 0 : index
      %c0_45 = arith.constant 0 : index
      %c0_46 = arith.constant 0 : index
      %64 = vector.load %arg6[%c0_44, %c0_45, %c0_46] : memref<1x4x1xf32, #tpu.memory_space<vmem>>, vector<1x4x1xf32>
      tpu.vector_store %arg6[%c0_44, %c0_45, %c0_46], %63 {strides = array<i32>} : memref<1x4x1xf32, #tpu.memory_space<vmem>>, vector<1x4x1xf32>,
      %cst_47 = arith.constant 0.000000e+00 : f32
      %65 = vector.broadcast %cst_47 : f32 to vector<1x4x1xf32>
      %c0_48 = arith.constant 0 : index
      %c0_49 = arith.constant 0 : index
      %c0_50 = arith.constant 0 : index
      %66 = vector.load %arg7[%c0_48, %c0_49, %c0_50] : memref<1x4x1xf32, #tpu.memory_space<vmem>>, vector<1x4x1xf32>
      tpu.vector_store %arg7[%c0_48, %c0_49, %c0_50], %65 {strides = array<i32>} : memref<1x4x1xf32, #tpu.memory_space<vmem>>, vector<1x4x1xf32>,
    } else {
    }
    %c0 = arith.constant 0 : index
    %c0_1 = arith.constant 0 : index
    %c0_2 = arith.constant 0 : index
    %3 = vector.load %arg2[%c0, %c0_1, %c0_2] : memref<1x4x256xf32, #tpu.memory_space<vmem>>, vector<1x4x256xf32>
    %4 = vector.shape_cast %3 : vector<1x4x256xf32> to vector<4x256xf32>
    %c0_3 = arith.constant 0 : index
    %c0_4 = arith.constant 0 : index
    %c0_5 = arith.constant 0 : index
    %5 = vector.load %arg3[%c0_3, %c0_4, %c0_5] : memref<1x1x256xi32, #tpu.memory_space<vmem>>, vector<1x1x256xi32>
    %6 = vector.shape_cast %5 : vector<1x1x256xi32> to vector<1x256xi32>
    %cst = arith.constant dense<0xFF800000> : vector<256xf32>
    %7 = vector.multi_reduction <maximumf>, %4, %cst [0] : vector<4x256xf32> to vector<256xf32>
    %8 = vector.shape_cast %7 : vector<256xf32> to vector<1x256xf32>
    %9 = vector.broadcast %8 : vector<1x256xf32> to vector<4x256xf32>
    %10 = arith.subf %4, %9 : vector<4x256xf32>
    %11 = math.exp %10 : vector<4x256xf32>
    %cst_6 = arith.constant dense<0.000000e+00> : vector<256xf32>
    %12 = vector.multi_reduction <add>, %11, %cst_6 [0] : vector<4x256xf32> to vector<256xf32>
    %13 = vector.shape_cast %12 : vector<256xf32> to vector<1x256xf32>
    %14 = vector.broadcast %13 : vector<1x256xf32> to vector<4x256xf32>
    %15 = arith.divf %11, %14 : vector<4x256xf32>
    %16 = tpu.iota {dimensions = array<i32: 0>} : vector<4x256xi32>
    %17 = vector.broadcast %6 : vector<1x256xi32> to vector<4x256xi32>
    %18 = arith.cmpi eq, %17, %16 : vector<4x256xi32>
    %19 = arith.extui %18 : vector<4x256xi1> to vector<4x256xi32>
    %20 = arith.sitofp %19 : vector<4x256xi32> to vector<4x256xf32>
    %21 = math.log %13 : vector<1x256xf32>
    %22 = arith.addf %8, %21 : vector<1x256xf32>
    %23 = vector.broadcast %22 : vector<1x256xf32> to vector<4x256xf32>
    %24 = arith.subf %23, %4 : vector<4x256xf32>
    %25 = arith.mulf %20, %24 : vector<4x256xf32>
    %c0_7 = arith.constant 0 : index
    %c0_8 = arith.constant 0 : index
    %c0_9 = arith.constant 0 : index
    %26 = vector.load %arg4[%c0_7, %c0_8, %c0_9] : memref<1x4x1xf32, #tpu.memory_space<vmem>>, vector<1x4x1xf32>
    %27 = vector.shape_cast %26 : vector<1x4x1xf32> to vector<4x1xf32>
    %28 = arith.mulf %15, %20 : vector<4x256xf32>
    %cst_10 = arith.constant dense<0.000000e+00> : vector<4xf32>
    %29 = vector.multi_reduction <add>, %28, %cst_10 [1] : vector<4x256xf32> to vector<4xf32>
    %30 = vector.shape_cast %29 : vector<4xf32> to vector<4x1xf32>
    %31 = arith.addf %27, %30 : vector<4x1xf32>
    %c0_11 = arith.constant 0 : index
    %c0_12 = arith.constant 0 : index
    %c0_13 = arith.constant 0 : index
    %32 = vector.load %arg4[%c0_11, %c0_12, %c0_13] : memref<1x4x1xf32, #tpu.memory_space<vmem>>, vector<1x4x1xf32>
    %33 = vector.shape_cast %32 : vector<1x4x1xf32> to vector<4x1xf32>
    %34 = vector.shape_cast %31 : vector<4x1xf32> to vector<1x4x1xf32>
    tpu.vector_store %arg4[%c0_11, %c0_12, %c0_13], %34 {strides = array<i32>} : memref<1x4x1xf32, #tpu.memory_space<vmem>>, vector<1x4x1xf32>,
    %c0_14 = arith.constant 0 : index
    %c0_15 = arith.constant 0 : index
    %c0_16 = arith.constant 0 : index
    %35 = vector.load %arg5[%c0_14, %c0_15, %c0_16] : memref<1x4x1xf32, #tpu.memory_space<vmem>>, vector<1x4x1xf32>
    %36 = vector.shape_cast %35 : vector<1x4x1xf32> to vector<4x1xf32>
    %cst_17 = arith.constant dense<0.000000e+00> : vector<4xf32>
    %37 = vector.multi_reduction <add>, %15, %cst_17 [1] : vector<4x256xf32> to vector<4xf32>
    %38 = vector.shape_cast %37 : vector<4xf32> to vector<4x1xf32>
    %39 = arith.addf %36, %38 : vector<4x1xf32>
    %c0_18 = arith.constant 0 : index
    %c0_19 = arith.constant 0 : index
    %c0_20 = arith.constant 0 : index
    %40 = vector.load %arg5[%c0_18, %c0_19, %c0_20] : memref<1x4x1xf32, #tpu.memory_space<vmem>>, vector<1x4x1xf32>
    %41 = vector.shape_cast %40 : vector<1x4x1xf32> to vector<4x1xf32>
    %42 = vector.shape_cast %39 : vector<4x1xf32> to vector<1x4x1xf32>
    tpu.vector_store %arg5[%c0_18, %c0_19, %c0_20], %42 {strides = array<i32>} : memref<1x4x1xf32, #tpu.memory_space<vmem>>, vector<1x4x1xf32>,
    %c0_21 = arith.constant 0 : index
    %c0_22 = arith.constant 0 : index
    %c0_23 = arith.constant 0 : index
    %43 = vector.load %arg6[%c0_21, %c0_22, %c0_23] : memref<1x4x1xf32, #tpu.memory_space<vmem>>, vector<1x4x1xf32>
    %44 = vector.shape_cast %43 : vector<1x4x1xf32> to vector<4x1xf32>
    %cst_24 = arith.constant dense<0.000000e+00> : vector<4xf32>
    %45 = vector.multi_reduction <add>, %20, %cst_24 [1] : vector<4x256xf32> to vector<4xf32>
    %46 = vector.shape_cast %45 : vector<4xf32> to vector<4x1xf32>
    %47 = arith.addf %44, %46 : vector<4x1xf32>
    %c0_25 = arith.constant 0 : index
    %c0_26 = arith.constant 0 : index
    %c0_27 = arith.constant 0 : index
    %48 = vector.load %arg6[%c0_25, %c0_26, %c0_27] : memref<1x4x1xf32, #tpu.memory_space<vmem>>, vector<1x4x1xf32>
    %49 = vector.shape_cast %48 : vector<1x4x1xf32> to vector<4x1xf32>
    %50 = vector.shape_cast %47 : vector<4x1xf32> to vector<1x4x1xf32>
    tpu.vector_store %arg6[%c0_25, %c0_26, %c0_27], %50 {strides = array<i32>} : memref<1x4x1xf32, #tpu.memory_space<vmem>>, vector<1x4x1xf32>,
    %c0_28 = arith.constant 0 : index
    %c0_29 = arith.constant 0 : index
    %c0_30 = arith.constant 0 : index
    %51 = vector.load %arg7[%c0_28, %c0_29, %c0_30] : memref<1x4x1xf32, #tpu.memory_space<vmem>>, vector<1x4x1xf32>
    %52 = vector.shape_cast %51 : vector<1x4x1xf32> to vector<4x1xf32>
    %cst_31 = arith.constant dense<0.000000e+00> : vector<4xf32>
    %53 = vector.multi_reduction <add>, %25, %cst_31 [1] : vector<4x256xf32> to vector<4xf32>
    %54 = vector.shape_cast %53 : vector<4xf32> to vector<4x1xf32>
    %55 = arith.addf %52, %54 : vector<4x1xf32>
    %c0_32 = arith.constant 0 : index
    %c0_33 = arith.constant 0 : index
    %c0_34 = arith.constant 0 : index
    %56 = vector.load %arg7[%c0_32, %c0_33, %c0_34] : memref<1x4x1xf32, #tpu.memory_space<vmem>>, vector<1x4x1xf32>
    %57 = vector.shape_cast %56 : vector<1x4x1xf32> to vector<4x1xf32>
    %58 = vector.shape_cast %55 : vector<4x1xf32> to vector<1x4x1xf32>
    tpu.vector_store %arg7[%c0_32, %c0_33, %c0_34], %58 {strides = array<i32>} : memref<1x4x1xf32, #tpu.memory_space<vmem>>, vector<1x4x1xf32>,
    return
  }
  func.func @transform_0(%arg0: i32, %arg1: i32) -> (i32, i32, i32) {
    %c0_i32 = arith.constant 0 : i32
    %c0_i32_0 = arith.constant 0 : i32
    return %arg0, %c0_i32, %arg1 : i32, i32, i32
  }
  func.func @transform_1(%arg0: i32, %arg1: i32) -> (i32, i32, i32) {
    %c0_i32 = arith.constant 0 : i32
    %c0_i32_0 = arith.constant 0 : i32
    return %arg0, %c0_i32, %arg1 : i32, i32, i32
  }
  func.func @transform_2(%arg0: i32, %arg1: i32) -> (i32, i32, i32) {
    %c0_i32 = arith.constant 0 : i32
    %c0_i32_0 = arith.constant 0 : i32
    %c0_i32_1 = arith.constant 0 : i32
    return %arg0, %c0_i32, %c0_i32_0 : i32, i32, i32
  }
  func.func @transform_3(%arg0: i32, %arg1: i32) -> (i32, i32, i32) {
    %c0_i32 = arith.constant 0 : i32
    %c0_i32_0 = arith.constant 0 : i32
    %c0_i32_1 = arith.constant 0 : i32
    return %arg0, %c0_i32, %c0_i32_0 : i32, i32, i32
  }
  func.func @transform_4(%arg0: i32, %arg1: i32) -> (i32, i32, i32) {
    %c0_i32 = arith.constant 0 : i32
    %c0_i32_0 = arith.constant 0 : i32
    %c0_i32_1 = arith.constant 0 : i32
    return %arg0, %c0_i32, %c0_i32_0 : i32, i32, i32
  }
  func.func @transform_5(%arg0: i32, %arg1: i32) -> (i32, i32, i32) {
    %c0_i32 = arith.constant 0 : i32
    %c0_i32_0 = arith.constant 0 : i32
    %c0_i32_1 = arith.constant 0 : i32
    return %arg0, %c0_i32, %c0_i32_0 : i32, i32, i32
  }
}

</mosaic_0001>

<llo_original>
// kernel: combined_loss.1
$region0: #{combined_loss.1}
  #allocation0 [shape = 'u32[]', space=smem, size = 0x4, offset = 0x4, fixed_abs, tag = 'smem constant byte address 0x4 - core index']
  #allocation1 [shape = 'u32[144,128]{1,0:T(1,128)}', space=vmem, size = 0x12000, scoped, tag = 'internal scratch']
  %s0 = inlined_call_operand.vmem [shape: f32[2,4,256], index: 0, kind: input, shape index: {}]
  %s1 = inlined_call_operand.vmem [shape: s32[2,1,256], index: 1, kind: input, shape index: {}]
  %s2 = inlined_call_operand.vmem [shape: f32[2,4,1], index: 2, kind: output, shape index: {0}]
  %s3 = inlined_call_operand.vmem [shape: f32[2,4,1], index: 3, kind: output, shape index: {1}]
  %s4 = inlined_call_operand.vmem [shape: f32[2,4,1], index: 4, kind: output, shape index: {2}]
  %s5 = inlined_call_operand.vmem [shape: f32[2,4,1], index: 5, kind: output, shape index: {3}]
  %6 = xla_tuple %s2, %s3, %s4, %s5
  %s7 = sld [smem:[#allocation0]]
  $region69: #{combined_loss.1} parent=0
    _
  %s9 = ssub.s32 1, %s7
  %s10 = scalar_select 0, %s9, %s7
  loop: start=0, step=1, limit=4
  $region2: #{combined_loss.1} parent=0 // loop_pre_header
    _
  $region3: #{combined_loss.1} parent=0 // loop_header
    %s12 = sphi 0, %s16
    %p13 = scmp.ge.s32.totalorder %s12, 4
    %s19 = sphi 0, %s31
    %s20 = sphi 0, %s27
    %s21 = sphi 0, %s19
    %s22 = sphi 0, %s20
    %s23 = sphi 0, %s21
    %s24 = sphi 0, %s22
    %s36 = sphi 0, %s38
    %s39 = sphi 0, %s36
    %s40 = sphi 0, %s39
    %s56 = sphi 0, %s40
    %s64 = sphi 0, %s66
    %s67 = sphi 0, %s64
    %s68 = sphi 0, %s67
    %s84 = sphi 0, %s68
    %s90 = sphi 0, %s92
    %s93 = sphi 0, %s90
    %s94 = sphi 0, %s93
    %s110 = sphi 0, %s94
    %s116 = sphi 0, %s118
    %s119 = sphi 0, %s116
    %s120 = sphi 0, %s119
    %s136 = sphi 0, %s120
    %s142 = sphi 0, %s144
    %s145 = sphi 0, %s142
    %s146 = sphi 0, %s145
    %s162 = sphi 0, %s146
    %s168 = sphi 0, %s170
    %s171 = sphi 0, %s168
    %s172 = sphi 0, %s171
    %s188 = sphi 0, %s172
  $region4: #{combined_loss.1} parent=0 // loop_header_branch
    %15 = sbr.rel (%p13) target = $region8
  $region5: #{combined_loss.1} parent=0 // loop_body
    %s17 = ssub.s32 %s12, 1
    %s18 = ssub.s32 %s12, 2
    %s25 = sadd.s32 1, %s20
    %p26 = scmp.ge.s32.totalorder %s25, 1
    %s27 = scalar_select %p26, 0, %s25
    %s28 = sadd.s32 1, %s19
    %s29 = scalar_select %p26, %s28, %s19
    %p30 = scmp.ge.s32.totalorder %s29, 2
    %s31 = scalar_select %p30, 0, %s29
    %s32 = ssub.s32 %s19, %s31
    %s33 = ssub.s32 %s20, %s27
    %s34 = sor.u32 %s32, %s33
    %p35 = scmp.eq.s32.totalorder %s34, 0
    %s37 = sadd.s32 %s36, 1
    %s38 = scalar_select %p35, %s36, %s37
    %p41 = pneg %p35
    %p42 = scmp.eq.s32.totalorder %s12, 1
    %p43 = por %p41, %p42
    %p44 = scmp.ne.s32.totalorder %s36, %s39
    %p45 = scmp.eq.s32.totalorder %s12, 0
    %p46 = por %p44, %p45
    %p47 = scmp.ne.s32.totalorder %s36, %s39
    %p48 = scmp.eq.s32.totalorder %s17, 1
    %p49 = por %p47, %p48
    %p50 = scmp.ne.s32.totalorder %s39, %s40
    %p51 = scmp.eq.s32.totalorder %s17, 0
    %p52 = por %p50, %p51
    %p53 = scmp.ne.s32.totalorder %s39, %s40
    %p54 = scmp.eq.s32.totalorder %s18, 1
    %p55 = por %p53, %p54
    %p57 = scmp.ne.s32.totalorder %s40, %s56
    %p58 = scmp.eq.s32.totalorder %s18, 0
    %p59 = por %p57, %p58
    %s60 = ssub.s32 %s19, %s31
    %s61 = ssub.s32 %s20, %s27
    %s62 = sor.u32 %s60, %s61
    %p63 = scmp.eq.s32.totalorder %s62, 0
    %s65 = sadd.s32 %s64, 1
    %s66 = scalar_select %p63, %s64, %s65
    %p69 = pneg %p63
    %p70 = scmp.eq.s32.totalorder %s12, 1
    %p71 = por %p69, %p70
    %p72 = scmp.ne.s32.totalorder %s64, %s67
    %p73 = scmp.eq.s32.totalorder %s12, 0
    %p74 = por %p72, %p73
    %p75 = scmp.ne.s32.totalorder %s64, %s67
    %p76 = scmp.eq.s32.totalorder %s17, 1
    %p77 = por %p75, %p76
    %p78 = scmp.ne.s32.totalorder %s67, %s68
    %p79 = scmp.eq.s32.totalorder %s17, 0
    %p80 = por %p78, %p79
    %p81 = scmp.ne.s32.totalorder %s67, %s68
    %p82 = scmp.eq.s32.totalorder %s18, 1
    %p83 = por %p81, %p82
    %p85 = scmp.ne.s32.totalorder %s68, %s84
    %p86 = scmp.eq.s32.totalorder %s18, 0
    %p87 = por %p85, %p86
    %s88 = ssub.s32 %s19, %s31
    %p89 = scmp.eq.s32.totalorder %s88, 0
    %s91 = sadd.s32 %s90, 1
    %s92 = scalar_select %p89, %s90, %s91
    %p95 = pneg %p89
    %p96 = scmp.eq.s32.totalorder %s12, 1
    %p97 = por %p95, %p96
    %p98 = scmp.ne.s32.totalorder %s90, %s93
    %p99 = scmp.eq.s32.totalorder %s12, 0
    %p100 = por %p98, %p99
    %p101 = scmp.ne.s32.totalorder %s90, %s93
    %p102 = scmp.eq.s32.totalorder %s17, 1
    %p103 = por %p101, %p102
    %p104 = scmp.ne.s32.totalorder %s93, %s94
    %p105 = scmp.eq.s32.totalorder %s17, 0
    %p106 = por %p104, %p105
    %p107 = scmp.ne.s32.totalorder %s93, %s94
    %p108 = scmp.eq.s32.totalorder %s18, 1
    %p109 = por %p107, %p108
    %p111 = scmp.ne.s32.totalorder %s94, %s110
    %p112 = scmp.eq.s32.totalorder %s18, 0
    %p113 = por %p111, %p112
    %s114 = ssub.s32 %s19, %s31
    %p115 = scmp.eq.s32.totalorder %s114, 0
    %s117 = sadd.s32 %s116, 1
    %s118 = scalar_select %p115, %s116, %s117
    %p121 = pneg %p115
    %p122 = scmp.eq.s32.totalorder %s12, 1
    %p123 = por %p121, %p122
    %p124 = scmp.ne.s32.totalorder %s116, %s119
    %p125 = scmp.eq.s32.totalorder %s12, 0
    %p126 = por %p124, %p125
    %p127 = scmp.ne.s32.totalorder %s116, %s119
    %p128 = scmp.eq.s32.totalorder %s17, 1
    %p129 = por %p127, %p128
    %p130 = scmp.ne.s32.totalorder %s119, %s120
    %p131 = scmp.eq.s32.totalorder %s17, 0
    %p132 = por %p130, %p131
    %p133 = scmp.ne.s32.totalorder %s119, %s120
    %p134 = scmp.eq.s32.totalorder %s18, 1
    %p135 = por %p133, %p134
    %p137 = scmp.ne.s32.totalorder %s120, %s136
    %p138 = scmp.eq.s32.totalorder %s18, 0
    %p139 = por %p137, %p138
    %s140 = ssub.s32 %s19, %s31
    %p141 = scmp.eq.s32.totalorder %s140, 0
    %s143 = sadd.s32 %s142, 1
    %s144 = scalar_select %p141, %s142, %s143
    %p147 = pneg %p141
    %p148 = scmp.eq.s32.totalorder %s12, 1
    %p149 = por %p147, %p148
    %p150 = scmp.ne.s32.totalorder %s142, %s145
    %p151 = scmp.eq.s32.totalorder %s12, 0
    %p152 = por %p150, %p151
    %p153 = scmp.ne.s32.totalorder %s142, %s145
    %p154 = scmp.eq.s32.totalorder %s17, 1
    %p155 = por %p153, %p154
    %p156 = scmp.ne.s32.totalorder %s145, %s146
    %p157 = scmp.eq.s32.totalorder %s17, 0
    %p158 = por %p156, %p157
    %p159 = scmp.ne.s32.totalorder %s145, %s146
    %p160 = scmp.eq.s32.totalorder %s18, 1
    %p161 = por %p159, %p160
    %p163 = scmp.ne.s32.totalorder %s146, %s162
    %p164 = scmp.eq.s32.totalorder %s18, 0
    %p165 = por %p163, %p164
    %s166 = ssub.s32 %s19, %s31
    %p167 = scmp.eq.s32.totalorder %s166, 0
    %s169 = sadd.s32 %s168, 1
    %s170 = scalar_select %p167, %s168, %s169
    %p173 = pneg %p167
    %p174 = scmp.eq.s32.totalorder %s12, 1
    %p175 = por %p173, %p174
    %p176 = scmp.ne.s32.totalorder %s168, %s171
    %p177 = scmp.eq.s32.totalorder %s12, 0
    %p178 = por %p176, %p177
    %p179 = scmp.ne.s32.totalorder %s168, %s171
    %p180 = scmp.eq.s32.totalorder %s17, 1
    %p181 = por %p179, %p180
    %p182 = scmp.ne.s32.totalorder %s171, %s172
    %p183 = scmp.eq.s32.totalorder %s17, 0
    %p184 = por %p182, %p183
    %p185 = scmp.ne.s32.totalorder %s171, %s172
    %p186 = scmp.eq.s32.totalorder %s18, 1
    %p187 = por %p185, %p186
    %p189 = scmp.ne.s32.totalorder %s172, %s188
    %p190 = scmp.eq.s32.totalorder %s18, 0
    %p191 = por %p189, %p190
    %p192 = scmp.le.s32.totalorder 1, %s12
    %p193 = scmp.lt.s32.totalorder %s12, 3
    %p194 = pnand %p192, %p193
    %p195 = pneg %p194
    // Predicated region
    $region9: #{combined_loss.1} parent=5 // pred_check
      _
    $region10: #{combined_loss.1} parent=5 // pred_check_branch
      %197 = sbr.rel (%p194) target = $region12
    $region11: #{combined_loss.1} parent=5 // pred_region
      %s198 = ssub.s32 %s12, 1
    $region12: #{combined_loss.1} parent=5 // pred_fallthru
      _
    %p199 = scmp.lt.s32.totalorder %s12, 2
    // Predicated region
    $region13: #{combined_loss.1} parent=5 // pred_check
      %p200 = pneg %p199
    $region14: #{combined_loss.1} parent=5 // pred_check_branch
      %202 = sbr.rel (%p200) target = $region16
    $region15: #{combined_loss.1} parent=5 // pred_region
      // Predicated region
      $region17: #{combined_loss.1} parent=15 // pred_check
        %p203 = pneg %p46
      $region18: #{combined_loss.1} parent=15 // pred_check_branch
        %205 = sbr.rel (%p203) target = $region20
      $region19: #{combined_loss.1} parent=15 // pred_region
        %s206 = smul.u32 2, %s20
        %p207 = scmp.lt.s32.totalorder %s19, 1
        %s208 = scalar_select %p207, %s19, 1
        %p209 = scmp.lt.s32.totalorder %s206, 1
        %s210 = scalar_select %p209, %s206, 1
        %s211 = smul.addr %s208, 2
        %s212 = sadd.s32 %s210, %s211
        %s213 = smul.addr %s212, 4
        %s214 = scalar_lea.vmem %s0, %s213
        %s215 = smul.u32 2, %s20
      $region20: #{combined_loss.1} parent=15 // pred_fallthru
        _
      // Predicated region
      $region21: #{combined_loss.1} parent=15 // pred_check
        %p216 = pneg %p74
      $region22: #{combined_loss.1} parent=15 // pred_check_branch
        %218 = sbr.rel (%p216) target = $region24
      $region23: #{combined_loss.1} parent=15 // pred_region
        %s219 = smul.u32 2, %s20
        %p220 = scmp.lt.s32.totalorder %s19, 1
        %s221 = scalar_select %p220, %s19, 1
        %p222 = scmp.lt.s32.totalorder %s219, 1
        %s223 = scalar_select %p222, %s219, 1
        %s224 = smul.addr %s221, 2
        %s225 = sadd.s32 %s223, %s224
        %s226 = scalar_lea.vmem %s1, %s225
        %s227 = smul.u32 2, %s20
      $region24: #{combined_loss.1} parent=15 // pred_fallthru
        _
    $region16: #{combined_loss.1} parent=5 // pred_fallthru
      _
    %p228 = scmp.le.s32.totalorder 1, %s12
    %p229 = scmp.lt.s32.totalorder %s12, 3
    %p230 = pnand %p228, %p229
    %p231 = pneg %p230
    // Predicated region
    $region25: #{combined_loss.1} parent=5 // pred_check
      _
    $region26: #{combined_loss.1} parent=5 // pred_check_branch
      %233 = sbr.rel (%p230) target = $region28
    $region27: #{combined_loss.1} parent=5 // pred_region
      %s234 = ssub.s32 %s12, 1
      %s235 = smul.u32 2, %s22
      %p236 = scmp.lt.s32.totalorder %s21, 1
      %s237 = scalar_select %p236, %s21, 1
      %p238 = scmp.lt.s32.totalorder %s235, 1
      %s239 = scalar_select %p238, %s235, 1
      %s240 = smul.addr %s237, 2
      %s241 = sadd.s32 %s239, %s240
      %s242 = smul.addr %s241, 4
      %s243 = scalar_lea.vmem %s0, %s242
      %p244 = pneg %p52
      %p245 = pneg %p49
      %s246 = smul.u32 2, %s22
      %p247 = scmp.lt.s32.totalorder %s21, 1
      %s248 = scalar_select %p247, %s21, 1
      %p249 = scmp.lt.s32.totalorder %s246, 1
      %s250 = scalar_select %p249, %s246, 1
      %s251 = smul.addr %s248, 2
      %s252 = sadd.s32 %s250, %s251
      %s253 = scalar_lea.vmem %s1, %s252
      %p254 = pneg %p80
      %p255 = pneg %p77
      %p256 = pneg %p106
      %p257 = pneg %p103
      %p258 = scmp.lt.s32.totalorder %s21, 1
      %s259 = scalar_select %p258, %s21, 1
      %s260 = smul.addr %s259, 4
      %s261 = scalar_lea.vmem %s2, %s260
      %p262 = pneg %p132
      %p263 = pneg %p129
      %p264 = scmp.lt.s32.totalorder %s21, 1
      %s265 = scalar_select %p264, %s21, 1
      %s266 = smul.addr %s265, 4
      %s267 = scalar_lea.vmem %s3, %s266
      %p268 = pneg %p158
      %p269 = pneg %p155
      %p270 = scmp.lt.s32.totalorder %s21, 1
      %s271 = scalar_select %p270, %s21, 1
      %s272 = smul.addr %s271, 4
      %s273 = scalar_lea.vmem %s4, %s272
      %p274 = pneg %p184
      %p275 = pneg %p181
      %p276 = scmp.lt.s32.totalorder %s21, 1
      %s277 = scalar_select %p276, %s21, 1
      %s278 = smul.addr %s277, 4
      %s279 = scalar_lea.vmem %s5, %s278
      %s280 = smul.u32 2, %s22
      %p281 = scmp.lt.s32.totalorder %s21, 1
      %s282 = scalar_select %p281, %s21, 1
      %p283 = scmp.lt.s32.totalorder %s280, 1
      %s284 = scalar_select %p283, %s280, 1
      %s285 = smul.addr %s282, 2
      %s286 = sadd.s32 %s284, %s285
      %s287 = smul.addr %s286, 4
      %s288 = scalar_lea.vmem %s0, %s287
      %s289 = smul.u32 2, %s22
      %s290 = smul.u32 2, %s22
      %p291 = scmp.lt.s32.totalorder %s21, 1
      %s292 = scalar_select %p291, %s21, 1
      %p293 = scmp.lt.s32.totalorder %s290, 1
      %s294 = scalar_select %p293, %s290, 1
      %s295 = smul.addr %s292, 2
      %s296 = sadd.s32 %s294, %s295
      %s297 = scalar_lea.vmem %s1, %s296
      %s298 = smul.u32 2, %s22
      %p299 = scmp.lt.s32.totalorder %s21, 1
      %s300 = scalar_select %p299, %s21, 1
      %s301 = smul.addr %s300, 4
      %s302 = scalar_lea.vmem %s2, %s301
      %p303 = scmp.lt.s32.totalorder %s21, 1
      %s304 = scalar_select %p303, %s21, 1
      %s305 = smul.addr %s304, 4
      %s306 = scalar_lea.vmem %s3, %s305
      %p307 = scmp.lt.s32.totalorder %s21, 1
      %s308 = scalar_select %p307, %s21, 1
      %s309 = smul.addr %s308, 4
      %s310 = scalar_lea.vmem %s4, %s309
      %p311 = scmp.lt.s32.totalorder %s21, 1
      %s312 = scalar_select %p311, %s21, 1
      %s313 = smul.addr %s312, 4
      %s314 = scalar_lea.vmem %s5, %s313
      %p315 = scmp.eq.s32.totalorder %s22, 0
      // Predicated region
      $region29: #{combined_loss.1} parent=27 // pred_check
        %p316 = pneg %p315
      $region30: #{combined_loss.1} parent=27 // pred_check_branch
        %318 = sbr.rel (%p316) target = $region32
      $region31: #{combined_loss.1} parent=27 // pred_region
        %vm319 = vcmask 3072
        %320 = vst.msk [vmem:[%s302] sm:$0xf] %vm319, 0.0
        %321 = vst.msk [vmem:[%s306] sm:$0xf] %vm319, 0.0
        %322 = vst.msk [vmem:[%s310] sm:$0xf] %vm319, 0.0
        %323 = vst.msk [vmem:[%s314] sm:$0xf] %vm319, 0.0
      $region32: #{combined_loss.1} parent=27 // pred_fallthru
        _
      %v324 = vld [vmem:[%s288] sm:$0xff]
      %v325 = vld [vmem:[%s297] sm:$0x3]
      %v327 = vcombine.high %v324, %v324
      %vm329 = vcmask 1043456
      %v330 = vsel %vm329, %v324, -inf
      %v331 = vrot.slane %v330, 4
      %v332 = vmax.f32 %v330, %v331
      %v333 = vrot.slane %v332, 2
      %v334 = vmax.f32 %v332, %v333
      %v335 = vrot.slane %v334, 1
      %v336 = vmax.f32 %v334, %v335
      %v337 = vsel %vm329, %v327, -inf
      %v338 = vrot.slane %v337, 4
      %v339 = vmax.f32 %v337, %v338
      %v340 = vrot.slane %v339, 2
      %v341 = vmax.f32 %v339, %v340
      %v342 = vrot.slane %v341, 1
      %v343 = vmax.f32 %v341, %v342
      %v346 = vcombine.low %v336, %v343
      %v348 = vsub.f32 %v324, %v346
      %v349 = vmul.f32 %v348, 1.442695
      %v350 = vpow.pop %v349
      %v352 = vcombine.high %v350, %v350
      %v354 = vsel %vm329, %v350, 0.0
      %v355 = vrot.slane %v354, 4
      %v356 = vadd.f32 %v354, %v355
      %v357 = vrot.slane %v356, 2
      %v358 = vadd.f32 %v356, %v357
      %v359 = vrot.slane %v358, 1
      %v360 = vadd.f32 %v358, %v359
      %v361 = vsel %vm329, %v352, 0.0
      %v362 = vrot.slane %v361, 4
      %v363 = vadd.f32 %v361, %v362
      %v364 = vrot.slane %v363, 2
      %v365 = vadd.f32 %v363, %v364
      %v366 = vrot.slane %v365, 1
      %v367 = vadd.f32 %v365, %v366
      %v370 = vcombine.low %v360, %v367
      %v372 = vrcp.pop %v370
      %v373 = vmul.f32 %v350, %v372
      %v374 = vlaneseq
      %v375 = vshrl.u32 %v374, 7
      %v376 = vlaneseq
      %v377 = vshrl.u32 %v376, 7
      %v378 = vsub.s32 0, %v377
      %v379 = vrot.slane %v325, %v378
      %v380 = vlaneseq
      %v381 = vshrl.u32 %v380, 7
      %v382 = vsub.s32 1, %v381
      %v383 = vrot.slane %v325, %v382
      %vm384 = vcmp.eq.s32.totalorder %v379, %v375
      %vm385 = vcmp.eq.s32.totalorder %v383, %v375
      %v386 = vsel %vm384, 1, 0
      %v387 = vsel %vm385, 1, 0
      %v388 = vcvt.s32.f32 %v386
      %v389 = vcvt.s32.f32 %v387
      %v390 = vlog2.pop %v360
      %v391 = vmul.f32 %v390, 0.6931472
      %v392 = vlog2.pop %v367
      %v393 = vmul.f32 %v392, 0.6931472
      %v394 = vadd.f32 %v336, %v391
      %v395 = vadd.f32 %v343, %v393
      %v396 = vsub.f32 %v394, %v324
      %v397 = vsub.f32 %v395, %v327
      %v398 = vmul.f32 %v388, %v396
      %v399 = vmul.f32 %v389, %v397
      %v400 = vld [vmem:[%s302] sm:$0xf]
      %v403 = vcombine.low %v388, %v389
      %v405 = vmul.f32 %v373, %v403
      %v407 = vcombine.high %v405, %v405
      %v409 = vsel %vm329, %v405, 0.0
      %v410 = vsel %vm329, %v407, 0.0
      %v411 = vadd.f32 %v409, %v410
      %412 = vadd.xlane.f32.xlu0 %v411
      %v413 = vpop.xlane.xlu0 %412
      %v414 = vadd.f32 %v400, %v413
      %vm415 = vcmask 3072
      %416 = vst.msk [vmem:[%s302] sm:$0xf] %vm415, %v414
      %v417 = vld [vmem:[%s306] sm:$0xf]
      %v419 = vcombine.high %v373, %v373
      %v421 = vsel %vm329, %v373, 0.0
      %v422 = vsel %vm329, %v419, 0.0
      %v423 = vadd.f32 %v421, %v422
      %424 = vadd.xlane.f32.xlu0 %v423
      %v425 = vpop.xlane.xlu0 %424
      %v426 = vadd.f32 %v417, %v425
      %427 = vst.msk [vmem:[%s306] sm:$0xf] %vm415, %v426
      %v428 = vld [vmem:[%s310] sm:$0xf]
      %v429 = vsel %vm329, %v388, 0.0
      %v430 = vsel %vm329, %v389, 0.0
      %v431 = vadd.f32 %v429, %v430
      %432 = vadd.xlane.f32.xlu0 %v431
      %v433 = vpop.xlane.xlu0 %432
      %v434 = vadd.f32 %v428, %v433
      %435 = vst.msk [vmem:[%s310] sm:$0xf] %vm415, %v434
      %v436 = vld [vmem:[%s314] sm:$0xf]
      %v437 = vsel %vm329, %v398, 0.0
      %v438 = vsel %vm329, %v399, 0.0
      %v439 = vadd.f32 %v437, %v438
      %440 = vadd.xlane.f32.xlu0 %v439
      %v441 = vpop.xlane.xlu0 %440
      %v442 = vadd.f32 %v436, %v441
      %443 = vst.msk [vmem:[%s314] sm:$0xf] %vm415, %v442
      %p444 = scmp.lt.s32.totalorder %s21, 1
      %s445 = scalar_select %p444, %s21, 1
      %s446 = smul.addr %s445, 4
      %s447 = scalar_lea.vmem %s2, %s446
      %p448 = scmp.lt.s32.totalorder %s21, 1
      %s449 = scalar_select %p448, %s21, 1
      %s450 = smul.addr %s449, 4
      %s451 = scalar_lea.vmem %s3, %s450
      %p452 = scmp.lt.s32.totalorder %s21, 1
      %s453 = scalar_select %p452, %s21, 1
      %s454 = smul.addr %s453, 4
      %s455 = scalar_lea.vmem %s4, %s454
      %p456 = scmp.lt.s32.totalorder %s21, 1
      %s457 = scalar_select %p456, %s21, 1
      %s458 = smul.addr %s457, 4
      %s459 = scalar_lea.vmem %s5, %s458
      // Predicated region
      $region33: #{combined_loss.1} parent=27 // pred_check
        %p460 = pneg %p103
      $region34: #{combined_loss.1} parent=27 // pred_check_branch
        %462 = sbr.rel (%p460) target = $region36
      $region35: #{combined_loss.1} parent=27 // pred_region
        _
      $region36: #{combined_loss.1} parent=27 // pred_fallthru
        _
      // Predicated region
      $region37: #{combined_loss.1} parent=27 // pred_check
        %p463 = pneg %p129
      $region38: #{combined_loss.1} parent=27 // pred_check_branch
        %465 = sbr.rel (%p463) target = $region40
      $region39: #{combined_loss.1} parent=27 // pred_region
        _
      $region40: #{combined_loss.1} parent=27 // pred_fallthru
        _
      // Predicated region
      $region41: #{combined_loss.1} parent=27 // pred_check
        %p466 = pneg %p155
      $region42: #{combined_loss.1} parent=27 // pred_check_branch
        %468 = sbr.rel (%p466) target = $region44
      $region43: #{combined_loss.1} parent=27 // pred_region
        _
      $region44: #{combined_loss.1} parent=27 // pred_fallthru
        _
      // Predicated region
      $region45: #{combined_loss.1} parent=27 // pred_check
        %p469 = pneg %p181
      $region46: #{combined_loss.1} parent=27 // pred_check_branch
        %471 = sbr.rel (%p469) target = $region48
      $region47: #{combined_loss.1} parent=27 // pred_region
        _
      $region48: #{combined_loss.1} parent=27 // pred_fallthru
        _
    $region28: #{combined_loss.1} parent=5 // pred_fallthru
      _
    %p472 = scmp.le.s32.totalorder 2, %s12
    // Predicated region
    $region49: #{combined_loss.1} parent=5 // pred_check
      %p473 = pneg %p472
    $region50: #{combined_loss.1} parent=5 // pred_check_branch
      %475 = sbr.rel (%p473) target = $region52
    $region51: #{combined_loss.1} parent=5 // pred_region
      %s476 = ssub.s32 %s12, 2
      // Predicated region
      $region53: #{combined_loss.1} parent=51 // pred_check
        %p477 = pneg %p109
      $region54: #{combined_loss.1} parent=51 // pred_check_branch
        %479 = sbr.rel (%p477) target = $region56
      $region55: #{combined_loss.1} parent=51 // pred_region
        %p480 = scmp.lt.s32.totalorder %s23, 1
        %s481 = scalar_select %p480, %s23, 1
        %s482 = smul.addr %s481, 4
        %s483 = scalar_lea.vmem %s2, %s482
      $region56: #{combined_loss.1} parent=51 // pred_fallthru
        _
      // Predicated region
      $region57: #{combined_loss.1} parent=51 // pred_check
        %p484 = pneg %p135
      $region58: #{combined_loss.1} parent=51 // pred_check_branch
        %486 = sbr.rel (%p484) target = $region60
      $region59: #{combined_loss.1} parent=51 // pred_region
        %p487 = scmp.lt.s32.totalorder %s23, 1
        %s488 = scalar_select %p487, %s23, 1
        %s489 = smul.addr %s488, 4
        %s490 = scalar_lea.vmem %s3, %s489
      $region60: #{combined_loss.1} parent=51 // pred_fallthru
        _
      // Predicated region
      $region61: #{combined_loss.1} parent=51 // pred_check
        %p491 = pneg %p161
      $region62: #{combined_loss.1} parent=51 // pred_check_branch
        %493 = sbr.rel (%p491) target = $region64
      $region63: #{combined_loss.1} parent=51 // pred_region
        %p494 = scmp.lt.s32.totalorder %s23, 1
        %s495 = scalar_select %p494, %s23, 1
        %s496 = smul.addr %s495, 4
        %s497 = scalar_lea.vmem %s4, %s496
      $region64: #{combined_loss.1} parent=51 // pred_fallthru
        _
      // Predicated region
      $region65: #{combined_loss.1} parent=51 // pred_check
        %p498 = pneg %p187
      $region66: #{combined_loss.1} parent=51 // pred_check_branch
        %500 = sbr.rel (%p498) target = $region68
      $region67: #{combined_loss.1} parent=51 // pred_region
        %p501 = scmp.lt.s32.totalorder %s23, 1
        %s502 = scalar_select %p501, %s23, 1
        %s503 = smul.addr %s502, 4
        %s504 = scalar_lea.vmem %s5, %s503
      $region68: #{combined_loss.1} parent=51 // pred_fallthru
        _
    $region52: #{combined_loss.1} parent=5 // pred_fallthru
      _
  $region6: #{combined_loss.1} parent=0 // loop_footer
    %s16 = sadd.s32 1, %s12
  $region7: #{combined_loss.1} parent=0 // loop_footer_branch
    %11 = sbr.rel target = $region3
  $region8: #{combined_loss.1} parent=0 // loop_exit
    _

</llo_original>
